<compile_context>
chip_gen: v6e
topology: v6e:2x2x1
jax: 0.10.0
libtpu: 0.0.40
codegen_flags: <defaults>
</compile_context>

<pallas_src>
import math

import jax
import jax.numpy as jnp
from jax.experimental import pallas as pl
from jax.experimental.pallas import tpu as pltpu

LANE = 128     # vreg lane width
SUBLANE = 8    # f32 sublane count


def _bert_embed_kernel(x_ref, w_ref, pe_ref, o_ref):
    # x_ref : (tm, F)      tile of the flattened (B*S, F) frames
    # w_ref : (F, E_pad)   pre-transposed frame_map weight (grid-invariant)
    # pe_ref: (tm, E_pad)  positional-encoding rows (bias already folded in)
    # o_ref : (tm, E_pad)
    x1 = jnp.dot(x_ref[...], w_ref[...], preferred_element_type=jnp.float32)
    o_ref[...] = (x1 + pe_ref[...]).astype(o_ref.dtype)


def make_positional_encoding(seq_len, d_model, dtype=jnp.float32):
    """Standard BERT sin/cos positional table, shape (seq_len, d_model)."""
    assert d_model % 2 == 0, "positional encoding assumes even d_model"
    position = jnp.arange(seq_len, dtype=jnp.float32)[:, None]          # (S, 1)
    div_term = jnp.exp(
        jnp.arange(0, d_model, 2, dtype=jnp.float32)
        * -(math.log(10000.0) / d_model)
    )                                                                    # (d_model/2,)
    ang = position * div_term                                            # (S, d_model/2)
    pe = jnp.zeros((seq_len, d_model), dtype=jnp.float32)
    pe = pe.at[:, 0::2].set(jnp.sin(ang))
    pe = pe.at[:, 1::2].set(jnp.cos(ang))
    return pe.astype(dtype)


def prepare_params(weight, bias, pe):
    """One-time 'module init' precompute (amortized over all forward calls):
      * transpose the (E, F) PyTorch weight to (F, E) so the kernel does x @ W,
      * fold the linear bias into the positional table,
      * pad the E (lane) dimension up to a multiple of 128 for unmasked stores.
    Returns (w_fe, pe_plus_b, e_pad).
    """
    E, F = weight.shape
    e_pad = ((E + LANE - 1) // LANE) * LANE
    w_fe = weight.T.astype(jnp.float32)                                   # (F, E)
    pe_b = pe.astype(jnp.float32) + bias.astype(jnp.float32)[None, :]     # (S, E)
    if e_pad != E:
        w_fe = jnp.pad(w_fe, ((0, 0), (0, e_pad - E)))
        pe_b = jnp.pad(pe_b, ((0, 0), (0, e_pad - E)))
    return w_fe, pe_b, e_pad


def _pick_tile_m(seq_len, target=256):
    """Largest multiple-of-8 divisor of S not exceeding `target`.

    tm must divide S so each M-tile maps onto a rectangular slice of the
    positional table, and must be a multiple of 8 (f32 sublane)."""
    divs = [d for d in range(SUBLANE, target + 1, SUBLANE) if seq_len % d == 0]
    return max(divs) if divs else seq_len


def bert_embedding_forward(sequence, w_fe, pe_b, embed_size, training=False):
    """sequence: (B, S, F) f32; w_fe: (F, E_pad); pe_b: (S, E_pad) (bias folded).

    Returns (B, S, embed_size)."""
    if training:
        # TODO(synk): implement dropout mask with pltpu.prng_seed/prng_random_bits.
        raise NotImplementedError("dropout only supported in eval mode (identity)")

    B, S, F = sequence.shape
    E_pad = w_fe.shape[1]
    assert w_fe.shape[0] == F
    assert pe_b.shape == (S, E_pad)
    assert S % SUBLANE == 0, "sequence length must be a multiple of 8 for this tiling"

    M = B * S
    tm = _pick_tile_m(S)
    n_pe_blocks = S // tm

    # Free reshape: (B, S, F) is row-major contiguous as (B*S, F).
    x2d = sequence.reshape(M, F)

    if n_pe_blocks == 1:
        pe_index_map = lambda m: (0, 0)
    else:
        # M-tile m starts at flat row m*tm; its position offset is (m*tm) mod S,
        # i.e. PE block index m mod (S // tm).
        pe_index_map = lambda m: (m % n_pe_blocks, 0)

    flops = 2 * M * F * E_pad
    bytes_accessed = 4 * (M * F + M * E_pad + F * E_pad + S * E_pad)

    out = pl.pallas_call(
        _bert_embed_kernel,
        out_shape=jax.ShapeDtypeStruct((M, E_pad), sequence.dtype),
        grid_spec=pltpu.PrefetchScalarGridSpec(
            num_scalar_prefetch=0,
            grid=(M // tm,),
            in_specs=[
                pl.BlockSpec((tm, F), lambda m: (m, 0)),      # x tile (streamed)
                pl.BlockSpec((F, E_pad), lambda m: (0, 0)),   # weight (grid-invariant)
                pl.BlockSpec((tm, E_pad), pe_index_map),      # PE(+bias) rows
            ],
            out_specs=pl.BlockSpec((tm, E_pad), lambda m: (m, 0)),
        ),
        compiler_params=pltpu.CompilerParams(
            # M axis is fully parallel (no cross-step accumulator); on v7x this
            # lets the two TensorCores split the grid.
            dimension_semantics=("parallel",),
        ),
        cost_estimate=pl.CostEstimate(
            flops=flops, transcendentals=0, bytes_accessed=bytes_accessed),
    )(x2d, w_fe, pe_b)

    # Strip lane padding (no-op when embed_size is already a multiple of 128).
    return out[:, :embed_size].reshape(B, S, embed_size)


def reference_forward(sequence, weight, bias, pe):
    x1 = jnp.einsum("bsf,ef->bse", sequence, weight) + bias[None, None, :]
    return x1 + pe[None, :, :]


if __name__ == "__main__":
    # Small shapes consistent with the module: batch=2, seq=8, frame_size=16, embed_size=32
    B, S, FRAME, EMBED = 2, 8, 16, 32

    key = jax.random.PRNGKey(0)
    k_x, k_w, k_b = jax.random.split(key, 3)

    sequence = jax.random.normal(k_x, (B, S, FRAME), dtype=jnp.float32)

    # Deterministic nn.Linear(frame_size, embed_size)-style init: U(-1/sqrt(F), 1/sqrt(F))
    bound = 1.0 / math.sqrt(FRAME)
    weight = jax.random.uniform(k_w, (EMBED, FRAME), minval=-bound, maxval=bound,
                                dtype=jnp.float32)
    bias = jax.random.uniform(k_b, (EMBED,), minval=-bound, maxval=bound,
                              dtype=jnp.float32)

    pe = make_positional_encoding(S, EMBED)

    # One-time parameter prep (module "init"), then the hot forward call.
    w_fe, pe_b, _ = prepare_params(weight, bias, pe)
    out = bert_embedding_forward(sequence, w_fe, pe_b, EMBED)
    out = jax.block_until_ready(out)

    ref = reference_forward(sequence, weight, bias, pe)
    assert out.shape == (B, S, EMBED), out.shape
    assert jnp.allclose(out, ref, atol=1e-5, rtol=1e-5), "mismatch vs reference"

    print("KERNEL_OK")
</pallas_src>

<mosaic_0001>
module attributes {stable_mosaic.version = 11 : i64} {
  func.func @_bert_embed_kernel(%arg0: i32, %arg1: memref<8x16xf32, #tpu.memory_space<vmem>>, %arg2: memref<16x128xf32, #tpu.memory_space<vmem>>, %arg3: memref<8x128xf32, #tpu.memory_space<vmem>>, %arg4: memref<8x128xf32, #tpu.memory_space<vmem>>) attributes {dimension_semantics = [#tpu.dimension_semantics<parallel>], iteration_bounds = array<i64: 2>, scalar_prefetch = 0 : i64, scratch_operands = 0 : i64, tpu.core_type = #tpu.core_type<tc>, window_params = [{transform_indices = @transform_0, window_bounds = array<i64: 8, 16>}, {pipeline_mode = #tpu.pipeline_mode<synchronous>, transform_indices = @transform_1, window_bounds = array<i64: 16, 128>}, {pipeline_mode = #tpu.pipeline_mode<synchronous>, transform_indices = @transform_2, window_bounds = array<i64: 8, 128>}, {transform_indices = @transform_3, window_bounds = array<i64: 8, 128>}]} {
    %c0 = arith.constant 0 : index
    %c0_0 = arith.constant 0 : index
    %0 = vector.load %arg1[%c0, %c0_0] : memref<8x16xf32, #tpu.memory_space<vmem>>, vector<8x16xf32>
    %c0_1 = arith.constant 0 : index
    %c0_2 = arith.constant 0 : index
    %1 = vector.load %arg2[%c0_1, %c0_2] : memref<16x128xf32, #tpu.memory_space<vmem>>, vector<16x128xf32>
    %cst = arith.constant dense<0.000000e+00> : vector<8x128xf32>
    %2 = tpu.matmul %0, %1, %cst {dimension_numbers = #tpu.dot_dimension_numbers<[1], [0], [0], [1], [0, 0, 1, 1], [], []>} : vector<8x16xf32>, vector<16x128xf32>, vector<8x128xf32> -> vector<8x128xf32>
    %c0_3 = arith.constant 0 : index
    %c0_4 = arith.constant 0 : index
    %3 = vector.load %arg3[%c0_3, %c0_4] : memref<8x128xf32, #tpu.memory_space<vmem>>, vector<8x128xf32>
    %4 = arith.addf %2, %3 : vector<8x128xf32>
    %c0_5 = arith.constant 0 : index
    %c0_6 = arith.constant 0 : index
    %5 = vector.load %arg4[%c0_5, %c0_6] : memref<8x128xf32, #tpu.memory_space<vmem>>, vector<8x128xf32>
    tpu.vector_store %arg4[%c0_5, %c0_6], %4 {strides = array<i32>} : memref<8x128xf32, #tpu.memory_space<vmem>>, vector<8x128xf32>,
    return
  }
  func.func @transform_0(%arg0: i32) -> (i32, i32) {
    %c0_i32 = arith.constant 0 : i32
    %c0_i32_0 = arith.constant 0 : i32
    return %arg0, %c0_i32 : i32, i32
  }
  func.func @transform_1(%arg0: i32) -> (i32, i32) {
    %c0_i32 = arith.constant 0 : i32
    %c0_i32_0 = arith.constant 0 : i32
    %c0_i32_1 = arith.constant 0 : i32
    return %c0_i32, %c0_i32_0 : i32, i32
  }
  func.func @transform_2(%arg0: i32) -> (i32, i32) {
    %c0_i32 = arith.constant 0 : i32
    %c0_i32_0 = arith.constant 0 : i32
    %c0_i32_1 = arith.constant 0 : i32
    return %c0_i32, %c0_i32_0 : i32, i32
  }
  func.func @transform_3(%arg0: i32) -> (i32, i32) {
    %c0_i32 = arith.constant 0 : i32
    %c0_i32_0 = arith.constant 0 : i32
    return %arg0, %c0_i32 : i32, i32
  }
}

</mosaic_0001>

<llo_original>
// kernel: tpu_custom_call.1
$region0: #{tpu_custom_call.1}
  #allocation0 [shape = 'u32[]', space=smem, size = 0x4, offset = 0x4, fixed_abs, tag = 'smem constant byte address 0x4 - core index']
  #allocation1 [shape = 'u32[144,128]{1,0:T(1,128)}', space=vmem, size = 0x12000, scoped, tag = 'internal scratch']
  %s0 = inlined_call_operand.hbm [shape: f32[16,16], index: 0, kind: input, shape index: {}]
  %s1 = inlined_call_operand.hbm [shape: f32[16,128], index: 1, kind: input, shape index: {}]
  %s2 = inlined_call_operand.hbm [shape: f32[8,128], index: 2, kind: input, shape index: {}]
  %s3 = inlined_call_operand.hbm [shape: f32[16,128], index: 3, kind: output, shape index: {}]
  %s4 = sld [smem:[#allocation0]]
  $region57: #{tpu_custom_call.1} parent=0
    _
  %s6 = ssub.s32 1, %s4
  %s7 = scalar_select 0, %s6, %s4
  $region1: #{tpu_custom_call.1} parent=0
    #allocation2 [shape = 'u8[8192]{0}', space=vmem, size = 0x2000, scoped, tag = 'input window, operand 0']
    #allocation3 [shape = 's32[2]{0}', space=sflag, size = 0x8, scoped, tag = 'scoped memory for tpu_custom_call.1']
    #allocation4 [shape = 's32[2]{0}', space=sflag, size = 0x8, scoped, tag = 'scoped memory for tpu_custom_call.1']
    #allocation5 [shape = 'u8[8192]{0}', space=vmem, size = 0x2000, scoped, tag = 'input window, operand 1, single buffered']
    #allocation6 [shape = 's32[1]{0}', space=sflag, size = 0x4, scoped, tag = 'scoped memory for tpu_custom_call.1']
    #allocation7 [shape = 'u8[4096]{0}', space=vmem, size = 0x1000, scoped, tag = 'input window, operand 2, single buffered']
    #allocation8 [shape = 'u8[8192]{0}', space=vmem, size = 0x2000, scoped, tag = 'output window, operand 0']
    %8 = vsyncpa [#allocation3], 0
    %s9 = scalar_lea.sflag [#allocation3], 1
    %10 = vsyncpa %s9, 0
    %11 = vsyncpa [#allocation6], 0
    %12 = vsyncpa [#allocation4], 0
    %s13 = scalar_lea.sflag [#allocation4], 1
    %14 = vsyncpa %s13, 0
    loop: start=0, step=1, limit=4
    $region2: #{tpu_custom_call.1} parent=1 // loop_pre_header
      _
    $region3: #{tpu_custom_call.1} parent=1 // loop_header
      %s16 = sphi 0, %s20
      %p17 = scmp.ge.s32.totalorder %s16, 4
      %s26 = sphi 0, %s28
      %s29 = sphi 0, %s26
      %s30 = sphi 0, %s29
      %s46 = sphi 0, %s30
      %s50 = sphi 0, %s50
      %s52 = sphi 0, %s50
      %s53 = sphi 0, %s52
      %s67 = sphi 0, %s53
      %s71 = sphi 0, %s71
      %s73 = sphi 0, %s71
      %s74 = sphi 0, %s73
      %s88 = sphi 0, %s74
      %s94 = sphi 0, %s96
      %s97 = sphi 0, %s94
      %s98 = sphi 0, %s97
      %s114 = sphi 0, %s98
    $region4: #{tpu_custom_call.1} parent=1 // loop_header_branch
      %19 = sbr.rel (%p17) target = $region8
    $region5: #{tpu_custom_call.1} parent=1 // loop_body
      %s21 = ssub.s32 %s16, 1
      %s22 = ssub.s32 %s16, 2
      %s23 = sadd.s32 %s16, 1
      %s24 = ssub.s32 %s16, %s23
      %p25 = scmp.eq.s32.totalorder %s24, 0
      %s27 = sadd.s32 %s26, 1
      %s28 = scalar_select %p25, %s26, %s27
      %p31 = pneg %p25
      %p32 = scmp.eq.s32.totalorder %s16, 1
      %p33 = por %p31, %p32
      %p34 = scmp.ne.s32.totalorder %s26, %s29
      %p35 = scmp.eq.s32.totalorder %s16, 0
      %p36 = por %p34, %p35
      %p37 = scmp.ne.s32.totalorder %s26, %s29
      %p38 = scmp.eq.s32.totalorder %s21, 1
      %p39 = por %p37, %p38
      %p40 = scmp.ne.s32.totalorder %s29, %s30
      %p41 = scmp.eq.s32.totalorder %s21, 0
      %p42 = por %p40, %p41
      %p43 = scmp.ne.s32.totalorder %s29, %s30
      %p44 = scmp.eq.s32.totalorder %s22, 1
      %p45 = por %p43, %p44
      %p47 = scmp.ne.s32.totalorder %s30, %s46
      %p48 = scmp.eq.s32.totalorder %s22, 0
      %p49 = por %p47, %p48
      %s51 = sadd.s32 %s50, 1
      %p54 = scmp.eq.s32.totalorder %s16, 1
      %p55 = scmp.ne.s32.totalorder %s50, %s52
      %p56 = scmp.eq.s32.totalorder %s16, 0
      %p57 = por %p55, %p56
      %p58 = scmp.ne.s32.totalorder %s50, %s52
      %p59 = scmp.eq.s32.totalorder %s21, 1
      %p60 = por %p58, %p59
      %p61 = scmp.ne.s32.totalorder %s52, %s53
      %p62 = scmp.eq.s32.totalorder %s21, 0
      %p63 = por %p61, %p62
      %p64 = scmp.ne.s32.totalorder %s52, %s53
      %p65 = scmp.eq.s32.totalorder %s22, 1
      %p66 = por %p64, %p65
      %p68 = scmp.ne.s32.totalorder %s53, %s67
      %p69 = scmp.eq.s32.totalorder %s22, 0
      %p70 = por %p68, %p69
      %s72 = sadd.s32 %s71, 1
      %p75 = scmp.eq.s32.totalorder %s16, 1
      %p76 = scmp.ne.s32.totalorder %s71, %s73
      %p77 = scmp.eq.s32.totalorder %s16, 0
      %p78 = por %p76, %p77
      %p79 = scmp.ne.s32.totalorder %s71, %s73
      %p80 = scmp.eq.s32.totalorder %s21, 1
      %p81 = por %p79, %p80
      %p82 = scmp.ne.s32.totalorder %s73, %s74
      %p83 = scmp.eq.s32.totalorder %s21, 0
      %p84 = por %p82, %p83
      %p85 = scmp.ne.s32.totalorder %s73, %s74
      %p86 = scmp.eq.s32.totalorder %s22, 1
      %p87 = por %p85, %p86
      %p89 = scmp.ne.s32.totalorder %s74, %s88
      %p90 = scmp.eq.s32.totalorder %s22, 0
      %p91 = por %p89, %p90
      %s92 = ssub.s32 %s16, %s23
      %p93 = scmp.eq.s32.totalorder %s92, 0
      %s95 = sadd.s32 %s94, 1
      %s96 = scalar_select %p93, %s94, %s95
      %p99 = pneg %p93
      %p100 = scmp.eq.s32.totalorder %s16, 1
      %p101 = por %p99, %p100
      %p102 = scmp.ne.s32.totalorder %s94, %s97
      %p103 = scmp.eq.s32.totalorder %s16, 0
      %p104 = por %p102, %p103
      %p105 = scmp.ne.s32.totalorder %s94, %s97
      %p106 = scmp.eq.s32.totalorder %s21, 1
      %p107 = por %p105, %p106
      %p108 = scmp.ne.s32.totalorder %s97, %s98
      %p109 = scmp.eq.s32.totalorder %s21, 0
      %p110 = por %p108, %p109
      %p111 = scmp.ne.s32.totalorder %s97, %s98
      %p112 = scmp.eq.s32.totalorder %s22, 1
      %p113 = por %p111, %p112
      %p115 = scmp.ne.s32.totalorder %s98, %s114
      %p116 = scmp.eq.s32.totalorder %s22, 0
      %p117 = por %p115, %p116
      %p118 = scmp.le.s32.totalorder 1, %s16
      %p119 = scmp.lt.s32.totalorder %s16, 3
      %p120 = pnand %p118, %p119
      %p121 = pneg %p120
      // Predicated region
      $region9: #{tpu_custom_call.1} parent=5 // pred_check
        _
      $region10: #{tpu_custom_call.1} parent=5 // pred_check_branch
        %123 = sbr.rel (%p120) target = $region12
      $region11: #{tpu_custom_call.1} parent=5 // pred_region
        %s124 = ssub.s32 %s16, 1
        // Predicated region
        $region13: #{tpu_custom_call.1} parent=11 // pred_check
          %p125 = pneg %p63
        $region14: #{tpu_custom_call.1} parent=11 // pred_check_branch
          %127 = sbr.rel (%p125) target = $region16
        $region15: #{tpu_custom_call.1} parent=11 // pred_region
          %s129 = ssub.s32 256, 256
          %130 = vsyncadd [#allocation6], %s129
          %s131 = sshll.u32 [#allocation5], 4
          %s132 = int_to_ptr.vmem [resolvable:$true] %s131
          %137 = dma.hbm_to_vmem [thread:$0]  %s1, 256, %s132, [#allocation6], 128, 128, 8
        $region16: #{tpu_custom_call.1} parent=11 // pred_fallthru
          _
        // Predicated region
        $region17: #{tpu_custom_call.1} parent=11 // pred_check
          %p138 = pneg %p84
        $region18: #{tpu_custom_call.1} parent=11 // pred_check_branch
          %140 = sbr.rel (%p138) target = $region20
        $region19: #{tpu_custom_call.1} parent=11 // pred_region
          %s142 = ssub.s32 128, 128
          %143 = vsyncadd [#allocation6], %s142
          %s145 = sshll.u32 [#allocation7], 4
          %s146 = int_to_ptr.vmem [resolvable:$true] %s145
          %148 = dma.hbm_to_vmem [thread:$0]  %s2, 128, %s146, [#allocation6]
        $region20: #{tpu_custom_call.1} parent=11 // pred_fallthru
          _
      $region12: #{tpu_custom_call.1} parent=5 // pred_fallthru
        _
      %p149 = scmp.lt.s32.totalorder %s16, 2
      // Predicated region
      $region21: #{tpu_custom_call.1} parent=5 // pred_check
        %p150 = pneg %p149
      $region22: #{tpu_custom_call.1} parent=5 // pred_check_branch
        %152 = sbr.rel (%p150) target = $region24
      $region23: #{tpu_custom_call.1} parent=5 // pred_region
        // Predicated region
        $region25: #{tpu_custom_call.1} parent=23 // pred_check
          %p153 = pneg %p36
        $region26: #{tpu_custom_call.1} parent=23 // pred_check_branch
          %155 = sbr.rel (%p153) target = $region28
        $region27: #{tpu_custom_call.1} parent=23 // pred_region
          %s156 = sand.u32 %s26, 1
          %s157 = scalar_lea.sflag [#allocation3], %s156
          %s158 = sand.u32 %s26, 1
          %s159 = smul.addr %s158, 8
          %s160 = scalar_lea.vmem [#allocation2], %s159
          %s162 = ssub.s32 128, 128
          %163 = vsyncadd %s157, %s162
          %s164 = smul.addr %s16, 128
          %s165 = scalar_lea.hbm %s0, %s164
          %s167 = sshll.u32 %s160, 4
          %s168 = int_to_ptr.vmem [resolvable:$true] %s167
          %170 = dma.hbm_to_vmem [thread:$0]  %s165, 128, %s168, %s157
        $region28: #{tpu_custom_call.1} parent=23 // pred_fallthru
          _
      $region24: #{tpu_custom_call.1} parent=5 // pred_fallthru
        _
      %p171 = scmp.le.s32.totalorder 1, %s16
      %p172 = scmp.lt.s32.totalorder %s16, 3
      %p173 = pnand %p171, %p172
      %p174 = pneg %p173
      // Predicated region
      $region29: #{tpu_custom_call.1} parent=5 // pred_check
        _
      $region30: #{tpu_custom_call.1} parent=5 // pred_check_branch
        %176 = sbr.rel (%p173) target = $region32
      $region31: #{tpu_custom_call.1} parent=5 // pred_region
        %s177 = ssub.s32 %s16, 1
        %s178 = sand.u32 %s29, 1
        %s179 = scalar_lea.sflag [#allocation3], %s178
        %s180 = sand.u32 %s29, 1
        %s181 = smul.addr %s180, 8
        %s182 = scalar_lea.vmem [#allocation2], %s181
        // Predicated region
        $region33: #{tpu_custom_call.1} parent=31 // pred_check
          %p183 = pneg %p42
        $region34: #{tpu_custom_call.1} parent=31 // pred_check_branch
          %185 = sbr.rel (%p183) target = $region36
        $region35: #{tpu_custom_call.1} parent=31 // pred_region
          %186 = dma.done %s179, 128
        $region36: #{tpu_custom_call.1} parent=31 // pred_fallthru
          _
        // Predicated region
        $region37: #{tpu_custom_call.1} parent=31 // pred_check
          %p187 = pneg %p63
        $region38: #{tpu_custom_call.1} parent=31 // pred_check_branch
          %189 = sbr.rel (%p187) target = $region40
        $region39: #{tpu_custom_call.1} parent=31 // pred_region
          %190 = dma.done [#allocation6], 256
        $region40: #{tpu_custom_call.1} parent=31 // pred_fallthru
          _
        // Predicated region
        $region41: #{tpu_custom_call.1} parent=31 // pred_check
          %p191 = pneg %p84
        $region42: #{tpu_custom_call.1} parent=31 // pred_check_branch
          %193 = sbr.rel (%p191) target = $region44
        $region43: #{tpu_custom_call.1} parent=31 // pred_region
          %194 = dma.done [#allocation6], 128
        $region44: #{tpu_custom_call.1} parent=31 // pred_fallthru
          _
        %s195 = sand.u32 %s29, 1
        %s196 = scalar_lea.sflag [#allocation3], %s195
        %s197 = sand.u32 %s29, 1
        %s198 = smul.addr %s197, 8
        %s199 = scalar_lea.vmem [#allocation2], %s198
        %p200 = pneg %p42
        %p201 = pneg %p39
        %p202 = pneg %p63
        %p203 = pneg %p60
        %p204 = pneg %p84
        %p205 = pneg %p81
        %p206 = pneg %p110
        %p207 = pneg %p107
        %s208 = sand.u32 %s97, 1
        %s209 = scalar_lea.sflag [#allocation4], %s208
        %s210 = sand.u32 %s97, 1
        %s211 = smul.addr %s210, 8
        %s212 = scalar_lea.vmem [#allocation8], %s211
        %v213 = vld [vmem:[%s182] sm:$0xff]
        %v214 = vld [vmem:[#allocation5] sm:$0xff]
        %v215 = vld [vmem:[#allocation5 + $0x8] sm:$0xff]
        %v216 = vld [vmem:[#allocation7] sm:$0xff]
        %vm217 = vcmask 130048
        %v219 = vsel %vm217, %v213, 0
        %221 = vmatprep.subr.mxu0 0.0
        %222 = vmatpush1.msra.mxu0 0.0
        %223 = vmatprep.subr.mxu0 0.0
        %224 = vmatpush1.msra.mxu0 0.0
        %225 = vmatprep.subr.mxu0 0.0
        %226 = vmatpush1.msra.mxu0 0.0
        %227 = vmatprep.subr.mxu0 0.0
        %228 = vmatpush1.msra.mxu0 0.0
        %229 = vmatprep.subr.mxu0 0.0
        %230 = vmatpush1.msra.mxu0 0.0
        %231 = vmatprep.subr.mxu0 0.0
        %232 = vmatpush1.msra.mxu0 0.0
        %233 = vmatprep.subr.mxu0 0.0
        %234 = vmatpush1.msra.mxu0 0.0
        %235 = vmatprep.subr.mxu0 0.0
        %236 = vmatpush1.msra.mxu0 0.0
        %237 = vmatprep.subr.mxu0 0.0
        %238 = vmatpush1.msra.mxu0 0.0
        %239 = vmatprep.subr.mxu0 0.0
        %240 = vmatpush1.msra.mxu0 0.0
        %241 = vmatprep.subr.mxu0 0.0
        %242 = vmatpush1.msra.mxu0 0.0
        %243 = vmatprep.subr.mxu0 0.0
        %244 = vmatpush1.msra.mxu0 0.0
        %245 = vmatprep.subr.mxu0 0.0
        %246 = vmatpush1.msra.mxu0 0.0
        %247 = vmatprep.subr.mxu0 0.0
        %248 = vmatpush1.msra.mxu0 0.0
        %249 = vmatprep.subr.mxu0 0.0
        %250 = vmatpush1.msra.mxu0 %v215
        %251 = vmatprep.subr.mxu0 0.0
        %252 = vmatpush1.msra.mxu0 %v214
        %253 = vmatprep.subr.mxu0 0.0
        %254 = vmatpush2.msra.mxu0 0.0
        %255 = vmatprep.subr.mxu0 0.0
        %256 = vmatpush2.msra.mxu0 0.0
        %257 = vmatprep.subr.mxu0 0.0
        %258 = vmatpush2.msra.mxu0 0.0
        %259 = vmatprep.subr.mxu0 0.0
        %260 = vmatpush2.msra.mxu0 0.0
        %261 = vmatprep.subr.mxu0 0.0
        %262 = vmatpush2.msra.mxu0 0.0
        %263 = vmatprep.subr.mxu0 0.0
        %264 = vmatpush2.msra.mxu0 0.0
        %265 = vmatprep.subr.mxu0 0.0
        %266 = vmatpush2.msra.mxu0 0.0
        %267 = vmatprep.subr.mxu0 0.0
        %268 = vmatpush2.msra.mxu0 0.0
        %269 = vmatprep.subr.mxu0 0.0
        %270 = vmatpush2.msra.mxu0 0.0
        %271 = vmatprep.subr.mxu0 0.0
        %272 = vmatpush2.msra.mxu0 0.0
        %273 = vmatprep.subr.mxu0 0.0
        %274 = vmatpush2.msra.mxu0 0.0
        %275 = vmatprep.subr.mxu0 0.0
        %276 = vmatpush2.msra.mxu0 0.0
        %277 = vmatprep.subr.mxu0 0.0
        %278 = vmatpush2.msra.mxu0 0.0
        %279 = vmatprep.subr.mxu0 0.0
        %280 = vmatpush2.msra.mxu0 0.0
        %281 = vmatprep.subr.mxu0 0.0
        %282 = vmatpush2.msra.mxu0 0.0
        %283 = vmatprep.subr.mxu0 0.0
        %284 = vmatpush2.msra.mxu0 0.0
        %285 = vmatprep.mubr.f32.mxu0 0.0
        %286 = vmatmul.mubr.f32.gmra.mxu0 %v219
        %v287 = vpop.f32.mrf.mxu0
        %v288 = vadd.f32 %v216, %v287
        %v289 = vpop.f32.mrf.mxu0
        %290 = vdwg.mxu0
        %291 = vst [vmem:[%s212] sm:$0xff] %v288
        %s292 = sand.u32 %s97, 1
        %s293 = scalar_lea.sflag [#allocation4], %s292
        %s294 = sand.u32 %s97, 1
        %s295 = smul.addr %s294, 8
        %s296 = scalar_lea.vmem [#allocation8], %s295
        // Predicated region
        $region45: #{tpu_custom_call.1} parent=31 // pred_check
          %p297 = pneg %p107
        $region46: #{tpu_custom_call.1} parent=31 // pred_check_branch
          %299 = sbr.rel (%p297) target = $region48
        $region47: #{tpu_custom_call.1} parent=31 // pred_region
          %s301 = ssub.s32 128, 128
          %302 = vsyncadd %s293, %s301
          %s303 = smul.addr %s21, 128
          %s304 = scalar_lea.hbm %s3, %s303
          %s306 = sshll.u32 %s296, 4
          %s307 = int_to_ptr.vmem [resolvable:$true] %s306
          %309 = dma.vmem_to_hbm [thread:$0]  %s307, 128, %s304, %s293
        $region48: #{tpu_custom_call.1} parent=31 // pred_fallthru
          _
      $region32: #{tpu_custom_call.1} parent=5 // pred_fallthru
        _
      %p310 = scmp.le.s32.totalorder 2, %s16
      // Predicated region
      $region49: #{tpu_custom_call.1} parent=5 // pred_check
        %p311 = pneg %p310
      $region50: #{tpu_custom_call.1} parent=5 // pred_check_branch
        %313 = sbr.rel (%p311) target = $region52
      $region51: #{tpu_custom_call.1} parent=5 // pred_region
        %s314 = ssub.s32 %s16, 2
        // Predicated region
        $region53: #{tpu_custom_call.1} parent=51 // pred_check
          %p315 = pneg %p113
        $region54: #{tpu_custom_call.1} parent=51 // pred_check_branch
          %317 = sbr.rel (%p315) target = $region56
        $region55: #{tpu_custom_call.1} parent=51 // pred_region
          %s318 = sand.u32 %s98, 1
          %s319 = scalar_lea.sflag [#allocation4], %s318
          %s320 = sand.u32 %s98, 1
          %s321 = smul.addr %s320, 8
          %s322 = scalar_lea.vmem [#allocation8], %s321
          %323 = dma.done %s319, 128
        $region56: #{tpu_custom_call.1} parent=51 // pred_fallthru
          _
      $region52: #{tpu_custom_call.1} parent=5 // pred_fallthru
        _
    $region6: #{tpu_custom_call.1} parent=1 // loop_footer
      %s20 = sadd.s32 1, %s16
    $region7: #{tpu_custom_call.1} parent=1 // loop_footer_branch
      %15 = sbr.rel target = $region3
    $region8: #{tpu_custom_call.1} parent=1 // loop_exit
      _
    %324 = vsyncpa [#allocation3], 1
    %s325 = scalar_lea.sflag [#allocation3], 1
    %326 = vsyncpa %s325, 1
    %327 = vsyncpa [#allocation6], 1
    %328 = vsyncpa [#allocation4], 1
    %s329 = scalar_lea.sflag [#allocation4], 1
    %330 = vsyncpa %s329, 1

</llo_original>
